<compile_context>
chip_gen: v6e
topology: v6e:2x2x1
jax: 0.10.0
libtpu: 0.0.40
codegen_flags: <defaults>
</compile_context>

<pallas_src>
import jax
import jax.numpy as jnp
from jax.experimental import pallas as pl
from jax.experimental.pallas import tpu as pltpu


def _round_up(a, b):
    return ((a + b - 1) // b) * b


def corr2d_kernel(w_ref, b_ref, x_ref, o_ref):
    """One output row-strip.

    w_ref: (kh, kw) SMEM scalars, b_ref: (1,) SMEM scalar,
    x_ref: (H_pad, W_pad) VMEM (whole padded input, resident across the grid),
    o_ref: (TILE_OH, OW_pad) VMEM output block for this strip (lane-dense).
    """
    kh, kw = w_ref.shape
    tile_oh, ow_pad = o_ref.shape

    # Load the halo'd input strip once; all taps slice this *value* (no ref re-reads).
    row0 = pl.multiple_of(pl.program_id(0) * tile_oh, tile_oh)
    xv = x_ref[pl.ds(row0, tile_oh + kh - 1), :]

    # Fold the bias into the accumulator init (saves one full VPU pass).
    acc = jnp.full((tile_oh, ow_pad), b_ref[0], dtype=jnp.float32)
    for ki in range(kh):            # tiny static loops, unrolled at trace time
        for kj in range(kw):
            acc = acc + w_ref[ki, kj] * xv[ki:ki + tile_oh, kj:kj + ow_pad]
    o_ref[...] = acc


def conv2d_forward(x, weight, bias, *, tile_oh=8):
    """corr2d(x, weight) + bias, shapes identical to the PyTorch module's forward."""
    H, W = x.shape
    kh, kw = weight.shape
    OH, OW = H - kh + 1, W - kw + 1

    # Lane-dense output padding + row-strip tiling.
    ow_pad = _round_up(max(OW, 1), 128)
    n_strips = max(1, (OH + tile_oh - 1) // tile_oh)
    oh_pad = n_strips * tile_oh
    h_pad = oh_pad + kh - 1          # every strip's halo read stays in-bounds
    w_pad = ow_pad + kw - 1          # every lane-shifted tap stays in-bounds

    x_pad = jnp.pad(x.astype(jnp.float32), ((0, h_pad - H), (0, w_pad - W)))

    # Whole (padded) input stays VMEM-resident across the grid; only the output is
    # strip-tiled.  Budget VMEM with headroom, clamped to v7x's 64 MiB per-TC VMEM.
    vmem_needed = 4 * (h_pad * w_pad + 2 * tile_oh * ow_pad)
    vmem_limit = int(min(64 * 1024 * 1024, max(16 * 1024 * 1024, 4 * vmem_needed)))

    out_pad = pl.pallas_call(
        corr2d_kernel,
        out_shape=jax.ShapeDtypeStruct((oh_pad, ow_pad), jnp.float32),
        grid=(n_strips,),
        in_specs=[
            pl.BlockSpec(memory_space=pltpu.MemorySpace.SMEM),   # weight (kh, kw)
            pl.BlockSpec(memory_space=pltpu.MemorySpace.SMEM),   # bias   (1,)
            pl.BlockSpec((h_pad, w_pad), lambda i: (0, 0)),      # x, resident block
        ],
        out_specs=pl.BlockSpec((tile_oh, ow_pad), lambda i: (i, 0)),
        compiler_params=pltpu.CompilerParams(
            dimension_semantics=("parallel",),   # strips shard across TCs on v7x
            vmem_limit_bytes=vmem_limit,
        ),
    )(weight.astype(jnp.float32), bias.astype(jnp.float32), x_pad)

    # Padded rows/cols were computed from zero-fill; slice them off here.
    return out_pad[:OH, :OW]


def corr2d_ref(x, k):
    """Pure-JAX reference of the PyTorch corr2d (for correctness check)."""
    kh, kw = k.shape
    oh, ow = x.shape[0] - kh + 1, x.shape[1] - kw + 1
    out = jnp.zeros((oh, ow), dtype=jnp.float32)
    for ki in range(kh):
        for kj in range(kw):
            out = out + k[ki, kj] * x[ki:ki + oh, kj:kj + ow]
    return out


if __name__ == "__main__":
    key = jax.random.PRNGKey(0)
    k_x, k_w = jax.random.split(key)

    # Small shapes consistent with the module's forward (single 2-D map).
    H, W = 16, 16
    kernel_size = (3, 3)

    x = jax.random.normal(k_x, (H, W), dtype=jnp.float32)
    # Matches nn.Parameter(torch.rand(kernel_size)): uniform [0, 1)
    weight = jax.random.uniform(k_w, kernel_size, dtype=jnp.float32)
    # Matches nn.Parameter(torch.zeros(1))
    bias = jnp.zeros((1,), dtype=jnp.float32)

    out = jax.block_until_ready(conv2d_forward(x, weight, bias))

    expected = corr2d_ref(x, weight) + bias[0]
    assert out.shape == (H - kernel_size[0] + 1, W - kernel_size[1] + 1)
    assert jnp.allclose(out, expected, atol=1e-5, rtol=1e-5)

    print("KERNEL_OK")
</pallas_src>

<mosaic_0001>
module attributes {stable_mosaic.version = 11 : i64} {
  func.func @corr2d_kernel(%arg0: i32, %arg1: memref<3x3xf32, #tpu.memory_space<smem>>, %arg2: memref<1xf32, #tpu.memory_space<smem>>, %arg3: memref<18x130xf32, #tpu.memory_space<vmem>>, %arg4: memref<8x128xf32, #tpu.memory_space<vmem>>) attributes {dimension_semantics = [#tpu.dimension_semantics<parallel>], iteration_bounds = array<i64: 2>, scalar_prefetch = 0 : i64, scratch_operands = 0 : i64, tpu.core_type = #tpu.core_type<tc>, window_params = [{transform_indices = @transform_0, window_bounds = array<i64: 3, 3>}, {transform_indices = @transform_1, window_bounds = array<i64: 1>}, {pipeline_mode = #tpu.pipeline_mode<synchronous>, transform_indices = @transform_2, window_bounds = array<i64: 18, 130>}, {transform_indices = @transform_3, window_bounds = array<i64: 8, 128>}]} {
    %c8_i32 = arith.constant 8 : i32
    %0 = arith.muli %arg0, %c8_i32 : i32
    %1 = tpu.assume_multiple %0, 8 : i32
    %2 = arith.index_cast %1 : i32 to index
    %c0 = arith.constant 0 : index
    %3 = vector.load %arg3[%2, %c0] : memref<18x130xf32, #tpu.memory_space<vmem>>, vector<10x130xf32>
    %c0_0 = arith.constant 0 : index
    %4 = memref.load %arg2[%c0_0] : memref<1xf32, #tpu.memory_space<smem>>
    %5 = vector.broadcast %4 : f32 to vector<8x128xf32>
    %c0_1 = arith.constant 0 : index
    %c0_2 = arith.constant 0 : index
    %6 = memref.load %arg1[%c0_1, %c0_2] : memref<3x3xf32, #tpu.memory_space<smem>>
    %7 = vector.extract_strided_slice %3 {offsets = [0, 0], sizes = [8, 128], strides = [1, 1]} : vector<10x130xf32> to vector<8x128xf32>
    %8 = vector.broadcast %6 : f32 to vector<8x128xf32>
    %9 = arith.mulf %8, %7 : vector<8x128xf32>
    %10 = arith.addf %5, %9 : vector<8x128xf32>
    %c0_3 = arith.constant 0 : index
    %c1 = arith.constant 1 : index
    %11 = memref.load %arg1[%c0_3, %c1] : memref<3x3xf32, #tpu.memory_space<smem>>
    %12 = vector.extract_strided_slice %3 {offsets = [0, 1], sizes = [8, 128], strides = [1, 1]} : vector<10x130xf32> to vector<8x128xf32>
    %13 = vector.broadcast %11 : f32 to vector<8x128xf32>
    %14 = arith.mulf %13, %12 : vector<8x128xf32>
    %15 = arith.addf %10, %14 : vector<8x128xf32>
    %c0_4 = arith.constant 0 : index
    %c2 = arith.constant 2 : index
    %16 = memref.load %arg1[%c0_4, %c2] : memref<3x3xf32, #tpu.memory_space<smem>>
    %17 = vector.extract_strided_slice %3 {offsets = [0, 2], sizes = [8, 128], strides = [1, 1]} : vector<10x130xf32> to vector<8x128xf32>
    %18 = vector.broadcast %16 : f32 to vector<8x128xf32>
    %19 = arith.mulf %18, %17 : vector<8x128xf32>
    %20 = arith.addf %15, %19 : vector<8x128xf32>
    %c1_5 = arith.constant 1 : index
    %c0_6 = arith.constant 0 : index
    %21 = memref.load %arg1[%c1_5, %c0_6] : memref<3x3xf32, #tpu.memory_space<smem>>
    %22 = vector.extract_strided_slice %3 {offsets = [1, 0], sizes = [8, 128], strides = [1, 1]} : vector<10x130xf32> to vector<8x128xf32>
    %23 = vector.broadcast %21 : f32 to vector<8x128xf32>
    %24 = arith.mulf %23, %22 : vector<8x128xf32>
    %25 = arith.addf %20, %24 : vector<8x128xf32>
    %c1_7 = arith.constant 1 : index
    %c1_8 = arith.constant 1 : index
    %26 = memref.load %arg1[%c1_7, %c1_8] : memref<3x3xf32, #tpu.memory_space<smem>>
    %27 = vector.extract_strided_slice %3 {offsets = [1, 1], sizes = [8, 128], strides = [1, 1]} : vector<10x130xf32> to vector<8x128xf32>
    %28 = vector.broadcast %26 : f32 to vector<8x128xf32>
    %29 = arith.mulf %28, %27 : vector<8x128xf32>
    %30 = arith.addf %25, %29 : vector<8x128xf32>
    %c1_9 = arith.constant 1 : index
    %c2_10 = arith.constant 2 : index
    %31 = memref.load %arg1[%c1_9, %c2_10] : memref<3x3xf32, #tpu.memory_space<smem>>
    %32 = vector.extract_strided_slice %3 {offsets = [1, 2], sizes = [8, 128], strides = [1, 1]} : vector<10x130xf32> to vector<8x128xf32>
    %33 = vector.broadcast %31 : f32 to vector<8x128xf32>
    %34 = arith.mulf %33, %32 : vector<8x128xf32>
    %35 = arith.addf %30, %34 : vector<8x128xf32>
    %c2_11 = arith.constant 2 : index
    %c0_12 = arith.constant 0 : index
    %36 = memref.load %arg1[%c2_11, %c0_12] : memref<3x3xf32, #tpu.memory_space<smem>>
    %37 = vector.extract_strided_slice %3 {offsets = [2, 0], sizes = [8, 128], strides = [1, 1]} : vector<10x130xf32> to vector<8x128xf32>
    %38 = vector.broadcast %36 : f32 to vector<8x128xf32>
    %39 = arith.mulf %38, %37 : vector<8x128xf32>
    %40 = arith.addf %35, %39 : vector<8x128xf32>
    %c2_13 = arith.constant 2 : index
    %c1_14 = arith.constant 1 : index
    %41 = memref.load %arg1[%c2_13, %c1_14] : memref<3x3xf32, #tpu.memory_space<smem>>
    %42 = vector.extract_strided_slice %3 {offsets = [2, 1], sizes = [8, 128], strides = [1, 1]} : vector<10x130xf32> to vector<8x128xf32>
    %43 = vector.broadcast %41 : f32 to vector<8x128xf32>
    %44 = arith.mulf %43, %42 : vector<8x128xf32>
    %45 = arith.addf %40, %44 : vector<8x128xf32>
    %c2_15 = arith.constant 2 : index
    %c2_16 = arith.constant 2 : index
    %46 = memref.load %arg1[%c2_15, %c2_16] : memref<3x3xf32, #tpu.memory_space<smem>>
    %47 = vector.extract_strided_slice %3 {offsets = [2, 2], sizes = [8, 128], strides = [1, 1]} : vector<10x130xf32> to vector<8x128xf32>
    %48 = vector.broadcast %46 : f32 to vector<8x128xf32>
    %49 = arith.mulf %48, %47 : vector<8x128xf32>
    %50 = arith.addf %45, %49 : vector<8x128xf32>
    %c0_17 = arith.constant 0 : index
    %c0_18 = arith.constant 0 : index
    %51 = vector.load %arg4[%c0_17, %c0_18] : memref<8x128xf32, #tpu.memory_space<vmem>>, vector<8x128xf32>
    tpu.vector_store %arg4[%c0_17, %c0_18], %50 {strides = array<i32>} : memref<8x128xf32, #tpu.memory_space<vmem>>, vector<8x128xf32>,
    return
  }
  func.func @transform_0(%arg0: i32) -> (i32, i32) {
    %c0_i32 = arith.constant 0 : i32
    %c0_i32_0 = arith.constant 0 : i32
    %c0_i32_1 = arith.constant 0 : i32
    return %c0_i32, %c0_i32_0 : i32, i32
  }
  func.func @transform_1(%arg0: i32) -> i32 {
    %c0_i32 = arith.constant 0 : i32
    %c0_i32_0 = arith.constant 0 : i32
    return %c0_i32 : i32
  }
  func.func @transform_2(%arg0: i32) -> (i32, i32) {
    %c0_i32 = arith.constant 0 : i32
    %c0_i32_0 = arith.constant 0 : i32
    %c0_i32_1 = arith.constant 0 : i32
    return %c0_i32, %c0_i32_0 : i32, i32
  }
  func.func @transform_3(%arg0: i32) -> (i32, i32) {
    %c0_i32 = arith.constant 0 : i32
    %c0_i32_0 = arith.constant 0 : i32
    return %arg0, %c0_i32 : i32, i32
  }
}

</mosaic_0001>

<llo_original>
// kernel: tpu_custom_call.1
$region0: #{tpu_custom_call.1}
  #allocation0 [shape = 'u32[]', space=smem, size = 0x4, offset = 0x4, fixed_abs, tag = 'smem constant byte address 0x4 - core index']
  #allocation1 [shape = 'u32[144,128]{1,0:T(1,128)}', space=vmem, size = 0x12000, scoped, tag = 'internal scratch']
  #allocation2 [shape = 'f32[1]{0:T(128)S(6)}', space=smem, size = 0x200, scoped, tag = 'scoped memory for tpu_custom_call.1']
  %s0 = inlined_call_operand.hbm [shape: f32[3,3], index: 0, kind: input, shape index: {}]
  %s1 = inlined_call_operand.<no memory space> [shape: f32[1], index: 1, kind: input, shape index: {}]
  %s2 = inlined_call_operand.hbm [shape: f32[18,130], index: 2, kind: input, shape index: {}]
  %s3 = inlined_call_operand.hbm [shape: f32[16,128], index: 3, kind: output, shape index: {}]
  %s4 = sld [smem:[#allocation0]]
  $region53: #{tpu_custom_call.1} parent=0
    _
  %s6 = ssub.s32 1, %s4
  %s7 = scalar_select 0, %s6, %s4
  %8 = sst [smem:[#allocation2]] %s1
  $region1: #{tpu_custom_call.1} parent=0
    #allocation3 [shape = 'u8[2048]{0}', space=smem, size = 0x800, scoped, tag = 'input window, operand 0, single buffered']
    #allocation4 [shape = 's32[2]{0}', space=sflag, size = 0x8, scoped, tag = 'scoped memory for tpu_custom_call.1']
    #allocation5 [shape = 's32[2]{0}', space=sflag, size = 0x8, scoped, tag = 'scoped memory for tpu_custom_call.1']
    #allocation6 [shape = 's32[2]{0}', space=sflag, size = 0x8, scoped, tag = 'scoped memory for tpu_custom_call.1']
    #allocation7 [shape = 'u8[24576]{0}', space=vmem, size = 0x6000, scoped, tag = 'input window, operand 2, single buffered']
    #allocation8 [shape = 'u8[8192]{0}', space=vmem, size = 0x2000, scoped, tag = 'output window, operand 0']
    %9 = vsyncpa [#allocation6], 0
    %10 = vsyncpa [#allocation4], 0
    %11 = vsyncpa [#allocation5], 0
    %s12 = scalar_lea.sflag [#allocation5], 1
    %13 = vsyncpa %s12, 0
    loop: start=0, step=1, limit=4
    $region2: #{tpu_custom_call.1} parent=1 // loop_pre_header
      _
    $region3: #{tpu_custom_call.1} parent=1 // loop_header
      %s15 = sphi 0, %s19
      %p16 = scmp.ge.s32.totalorder %s15, 4
      %s23 = sphi 0, %s23
      %s25 = sphi 0, %s23
      %s26 = sphi 0, %s25
      %s40 = sphi 0, %s26
      %s44 = sphi 0, %s44
      %s46 = sphi 0, %s44
      %s47 = sphi 0, %s46
      %s61 = sphi 0, %s47
      %s65 = sphi 0, %s65
      %s67 = sphi 0, %s65
      %s68 = sphi 0, %s67
      %s82 = sphi 0, %s68
      %s88 = sphi 0, %s90
      %s91 = sphi 0, %s88
      %s92 = sphi 0, %s91
      %s108 = sphi 0, %s92
    $region4: #{tpu_custom_call.1} parent=1 // loop_header_branch
      %18 = sbr.rel (%p16) target = $region8
    $region5: #{tpu_custom_call.1} parent=1 // loop_body
      %s20 = ssub.s32 %s15, 1
      %s21 = ssub.s32 %s15, 2
      %s22 = sadd.s32 %s15, 1
      %s24 = sadd.s32 %s23, 1
      %p27 = scmp.eq.s32.totalorder %s15, 1
      %p28 = scmp.ne.s32.totalorder %s23, %s25
      %p29 = scmp.eq.s32.totalorder %s15, 0
      %p30 = por %p28, %p29
      %p31 = scmp.ne.s32.totalorder %s23, %s25
      %p32 = scmp.eq.s32.totalorder %s20, 1
      %p33 = por %p31, %p32
      %p34 = scmp.ne.s32.totalorder %s25, %s26
      %p35 = scmp.eq.s32.totalorder %s20, 0
      %p36 = por %p34, %p35
      %p37 = scmp.ne.s32.totalorder %s25, %s26
      %p38 = scmp.eq.s32.totalorder %s21, 1
      %p39 = por %p37, %p38
      %p41 = scmp.ne.s32.totalorder %s26, %s40
      %p42 = scmp.eq.s32.totalorder %s21, 0
      %p43 = por %p41, %p42
      %s45 = sadd.s32 %s44, 1
      %p48 = scmp.eq.s32.totalorder %s15, 1
      %p49 = scmp.ne.s32.totalorder %s44, %s46
      %p50 = scmp.eq.s32.totalorder %s15, 0
      %p51 = por %p49, %p50
      %p52 = scmp.ne.s32.totalorder %s44, %s46
      %p53 = scmp.eq.s32.totalorder %s20, 1
      %p54 = por %p52, %p53
      %p55 = scmp.ne.s32.totalorder %s46, %s47
      %p56 = scmp.eq.s32.totalorder %s20, 0
      %p57 = por %p55, %p56
      %p58 = scmp.ne.s32.totalorder %s46, %s47
      %p59 = scmp.eq.s32.totalorder %s21, 1
      %p60 = por %p58, %p59
      %p62 = scmp.ne.s32.totalorder %s47, %s61
      %p63 = scmp.eq.s32.totalorder %s21, 0
      %p64 = por %p62, %p63
      %s66 = sadd.s32 %s65, 1
      %p69 = scmp.eq.s32.totalorder %s15, 1
      %p70 = scmp.ne.s32.totalorder %s65, %s67
      %p71 = scmp.eq.s32.totalorder %s15, 0
      %p72 = por %p70, %p71
      %p73 = scmp.ne.s32.totalorder %s65, %s67
      %p74 = scmp.eq.s32.totalorder %s20, 1
      %p75 = por %p73, %p74
      %p76 = scmp.ne.s32.totalorder %s67, %s68
      %p77 = scmp.eq.s32.totalorder %s20, 0
      %p78 = por %p76, %p77
      %p79 = scmp.ne.s32.totalorder %s67, %s68
      %p80 = scmp.eq.s32.totalorder %s21, 1
      %p81 = por %p79, %p80
      %p83 = scmp.ne.s32.totalorder %s68, %s82
      %p84 = scmp.eq.s32.totalorder %s21, 0
      %p85 = por %p83, %p84
      %s86 = ssub.s32 %s15, %s22
      %p87 = scmp.eq.s32.totalorder %s86, 0
      %s89 = sadd.s32 %s88, 1
      %s90 = scalar_select %p87, %s88, %s89
      %p93 = pneg %p87
      %p94 = scmp.eq.s32.totalorder %s15, 1
      %p95 = por %p93, %p94
      %p96 = scmp.ne.s32.totalorder %s88, %s91
      %p97 = scmp.eq.s32.totalorder %s15, 0
      %p98 = por %p96, %p97
      %p99 = scmp.ne.s32.totalorder %s88, %s91
      %p100 = scmp.eq.s32.totalorder %s20, 1
      %p101 = por %p99, %p100
      %p102 = scmp.ne.s32.totalorder %s91, %s92
      %p103 = scmp.eq.s32.totalorder %s20, 0
      %p104 = por %p102, %p103
      %p105 = scmp.ne.s32.totalorder %s91, %s92
      %p106 = scmp.eq.s32.totalorder %s21, 1
      %p107 = por %p105, %p106
      %p109 = scmp.ne.s32.totalorder %s92, %s108
      %p110 = scmp.eq.s32.totalorder %s21, 0
      %p111 = por %p109, %p110
      %p112 = scmp.le.s32.totalorder 1, %s15
      %p113 = scmp.lt.s32.totalorder %s15, 3
      %p114 = pnand %p112, %p113
      %p115 = pneg %p114
      // Predicated region
      $region9: #{tpu_custom_call.1} parent=5 // pred_check
        _
      $region10: #{tpu_custom_call.1} parent=5 // pred_check_branch
        %117 = sbr.rel (%p114) target = $region12
      $region11: #{tpu_custom_call.1} parent=5 // pred_region
        %s118 = ssub.s32 %s15, 1
        // Predicated region
        $region13: #{tpu_custom_call.1} parent=11 // pred_check
          %p119 = pneg %p36
        $region14: #{tpu_custom_call.1} parent=11 // pred_check_branch
          %121 = sbr.rel (%p119) target = $region16
        $region15: #{tpu_custom_call.1} parent=11 // pred_region
          %s123 = ssub.s32 64, 64
          %124 = vsyncadd [#allocation6], %s123
          %127 = dma.hbm_to_smem %s0, 64, [#allocation3], [#allocation6]
        $region16: #{tpu_custom_call.1} parent=11 // pred_fallthru
          _
        // Predicated region
        $region17: #{tpu_custom_call.1} parent=11 // pred_check
          %p128 = pneg %p57
        $region18: #{tpu_custom_call.1} parent=11 // pred_check_branch
          %130 = sbr.rel (%p128) target = $region20
        $region19: #{tpu_custom_call.1} parent=11 // pred_region
          _
        $region20: #{tpu_custom_call.1} parent=11 // pred_fallthru
          _
        // Predicated region
        $region21: #{tpu_custom_call.1} parent=11 // pred_check
          %p131 = pneg %p78
        $region22: #{tpu_custom_call.1} parent=11 // pred_check_branch
          %133 = sbr.rel (%p131) target = $region24
        $region23: #{tpu_custom_call.1} parent=11 // pred_region
          %s135 = ssub.s32 768, 768
          %136 = vsyncadd [#allocation4], %s135
          %s137 = sshll.u32 [#allocation7], 4
          %s138 = int_to_ptr.vmem [resolvable:$true] %s137
          %143 = dma.hbm_to_vmem [thread:$0]  %s2, 768, %s138, [#allocation4], 256, 256, 16
        $region24: #{tpu_custom_call.1} parent=11 // pred_fallthru
          _
      $region12: #{tpu_custom_call.1} parent=5 // pred_fallthru
        _
      %p144 = scmp.lt.s32.totalorder %s15, 2
      // Predicated region
      $region25: #{tpu_custom_call.1} parent=5 // pred_check
        %p145 = pneg %p144
      $region26: #{tpu_custom_call.1} parent=5 // pred_check_branch
        %147 = sbr.rel (%p145) target = $region28
      $region27: #{tpu_custom_call.1} parent=5 // pred_region
        _
      $region28: #{tpu_custom_call.1} parent=5 // pred_fallthru
        _
      %p148 = scmp.le.s32.totalorder 1, %s15
      %p149 = scmp.lt.s32.totalorder %s15, 3
      %p150 = pnand %p148, %p149
      %p151 = pneg %p150
      // Predicated region
      $region29: #{tpu_custom_call.1} parent=5 // pred_check
        _
      $region30: #{tpu_custom_call.1} parent=5 // pred_check_branch
        %153 = sbr.rel (%p150) target = $region32
      $region31: #{tpu_custom_call.1} parent=5 // pred_region
        %s154 = ssub.s32 %s15, 1
        // Predicated region
        $region33: #{tpu_custom_call.1} parent=31 // pred_check
          %p155 = pneg %p36
        $region34: #{tpu_custom_call.1} parent=31 // pred_check_branch
          %157 = sbr.rel (%p155) target = $region36
        $region35: #{tpu_custom_call.1} parent=31 // pred_region
          %158 = dma.done [#allocation6], 64
        $region36: #{tpu_custom_call.1} parent=31 // pred_fallthru
          _
        // Predicated region
        $region37: #{tpu_custom_call.1} parent=31 // pred_check
          %p159 = pneg %p78
        $region38: #{tpu_custom_call.1} parent=31 // pred_check_branch
          %161 = sbr.rel (%p159) target = $region40
        $region39: #{tpu_custom_call.1} parent=31 // pred_region
          %162 = dma.done [#allocation4], 768
        $region40: #{tpu_custom_call.1} parent=31 // pred_fallthru
          _
        %163 = sfence
        %p164 = pneg %p36
        %p165 = pneg %p33
        %p166 = pneg %p57
        %p167 = pneg %p54
        %p168 = pneg %p78
        %p169 = pneg %p75
        %p170 = pneg %p104
        %p171 = pneg %p101
        %s172 = sand.u32 %s91, 1
        %s173 = scalar_lea.sflag [#allocation5], %s172
        %s174 = sand.u32 %s91, 1
        %s175 = smul.addr %s174, 8
        %s176 = scalar_lea.vmem [#allocation8], %s175
        %s177 = smul.u32 %s20, 8
        %s178 = sshra.s32 %s177, 3
        %s179 = sand.u32 %s177, 7
        %s180 = smul.u32 %s178, 2
        %s181 = smul.addr %s180, 8
        %s182 = scalar_lea.vmem [#allocation7], %s181
        %v183 = vld [vmem:[%s182] sm:$0xff]
        %v184 = vld [vmem:[%s182 + $0x8] sm:$0xff]
        %v185 = vld [vmem:[%s182 + $0x10] sm:$0x3]
        %v186 = vld [vmem:[%s182 + $0x18] sm:$0x3]
        %s187 = sld [smem:[#allocation2]]
        %v188 = vstv %s187
        %s189 = sld [smem:[#allocation3]]
        %v190 = vstv %s189
        %v191 = vmul.f32 %v190, %v183
        %v192 = vadd.f32 %v188, %v191
        %s193 = sld [smem:[#allocation3 + $0x1]]
        %v194 = vstv %s193
        %v195 = vmul.f32 %v194, %v183
        %v196 = vmul.f32 %v194, %v184
        %199 = vrot.lane.b32.xlu0 %v195, 127
        %v200 = vpop.permute.xlu0 %199
        %201 = vrot.lane.b32.xlu0 %v196, 127
        %v202 = vpop.permute.xlu0 %201
        %vm203 = vcmask 1039360
        %v204 = vsel %vm203, %v200, %v202
        %v206 = vadd.f32 %v192, %v204
        %s207 = sld [smem:[#allocation3 + $0x2]]
        %v208 = vstv %s207
        %v209 = vmul.f32 %v208, %v183
        %v210 = vmul.f32 %v208, %v184
        %213 = vrot.lane.b32.xlu0 %v209, 126
        %v214 = vpop.permute.xlu0 %213
        %215 = vrot.lane.b32.xlu0 %v210, 126
        %v216 = vpop.permute.xlu0 %215
        %vm217 = vcmask 1031168
        %v218 = vsel %vm217, %v214, %v216
        %v220 = vadd.f32 %v206, %v218
        %s221 = sld [smem:[#allocation3 + $0x80]]
        %v222 = vstv %s221
        %v223 = vmul.f32 %v222, %v183
        %v224 = vmul.f32 %v222, %v185
        %vm227 = vcmask 1046528
        %v228 = vrot.slane %v223, 1
        %v229 = vrot.slane %v224, 1
        %v230 = vsel %vm227, %v228, %v229
        %v232 = vadd.f32 %v220, %v230
        %s233 = sld [smem:[#allocation3 + $0x81]]
        %v234 = vstv %s233
        %v235 = vmul.f32 %v234, %v183
        %v236 = vmul.f32 %v234, %v184
        %v237 = vmul.f32 %v234, %v185
        %v238 = vmul.f32 %v234, %v186
        %v243 = vrot.slane %v235, 1
        %v244 = vrot.slane %v237, 1
        %v245 = vsel %vm227, %v243, %v244
        %v246 = vrot.slane %v236, 1
        %v247 = vrot.slane %v238, 1
        %v248 = vsel %vm227, %v246, %v247
        %249 = vrot.lane.b32.xlu0 %v245, 127
        %v250 = vpop.permute.xlu0 %249
        %251 = vrot.lane.b32.xlu0 %v248, 127
        %v252 = vpop.permute.xlu0 %251
        %v253 = vsel %vm203, %v250, %v252
        %v255 = vadd.f32 %v232, %v253
        %s256 = sld [smem:[#allocation3 + $0x82]]
        %v257 = vstv %s256
        %v258 = vmul.f32 %v257, %v183
        %v259 = vmul.f32 %v257, %v184
        %v260 = vmul.f32 %v257, %v185
        %v261 = vmul.f32 %v257, %v186
        %v266 = vrot.slane %v258, 1
        %v267 = vrot.slane %v260, 1
        %v268 = vsel %vm227, %v266, %v267
        %v269 = vrot.slane %v259, 1
        %v270 = vrot.slane %v261, 1
        %v271 = vsel %vm227, %v269, %v270
        %272 = vrot.lane.b32.xlu0 %v268, 126
        %v273 = vpop.permute.xlu0 %272
        %274 = vrot.lane.b32.xlu0 %v271, 126
        %v275 = vpop.permute.xlu0 %274
        %v276 = vsel %vm217, %v273, %v275
        %v278 = vadd.f32 %v255, %v276
        %s279 = sld [smem:[#allocation3 + $0x100]]
        %v280 = vstv %s279
        %v281 = vmul.f32 %v280, %v183
        %v282 = vmul.f32 %v280, %v185
        %vm285 = vcmask 1045504
        %v286 = vrot.slane %v281, 2
        %v287 = vrot.slane %v282, 2
        %v288 = vsel %vm285, %v286, %v287
        %v290 = vadd.f32 %v278, %v288
        %s291 = sld [smem:[#allocation3 + $0x101]]
        %v292 = vstv %s291
        %v293 = vmul.f32 %v292, %v183
        %v294 = vmul.f32 %v292, %v184
        %v295 = vmul.f32 %v292, %v185
        %v296 = vmul.f32 %v292, %v186
        %v301 = vrot.slane %v293, 2
        %v302 = vrot.slane %v295, 2
        %v303 = vsel %vm285, %v301, %v302
        %v304 = vrot.slane %v294, 2
        %v305 = vrot.slane %v296, 2
        %v306 = vsel %vm285, %v304, %v305
        %307 = vrot.lane.b32.xlu0 %v303, 127
        %v308 = vpop.permute.xlu0 %307
        %309 = vrot.lane.b32.xlu0 %v306, 127
        %v310 = vpop.permute.xlu0 %309
        %v311 = vsel %vm203, %v308, %v310
        %v313 = vadd.f32 %v290, %v311
        %s314 = sld [smem:[#allocation3 + $0x102]]
        %v315 = vstv %s314
        %v316 = vmul.f32 %v315, %v183
        %v317 = vmul.f32 %v315, %v184
        %v318 = vmul.f32 %v315, %v185
        %v319 = vmul.f32 %v315, %v186
        %v324 = vrot.slane %v316, 2
        %v325 = vrot.slane %v318, 2
        %v326 = vsel %vm285, %v324, %v325
        %v327 = vrot.slane %v317, 2
        %v328 = vrot.slane %v319, 2
        %v329 = vsel %vm285, %v327, %v328
        %330 = vrot.lane.b32.xlu0 %v326, 126
        %v331 = vpop.permute.xlu0 %330
        %332 = vrot.lane.b32.xlu0 %v329, 126
        %v333 = vpop.permute.xlu0 %332
        %v334 = vsel %vm217, %v331, %v333
        %v336 = vadd.f32 %v313, %v334
        %337 = vst [vmem:[%s176] sm:$0xff] %v336
        %s338 = sand.u32 %s91, 1
        %s339 = scalar_lea.sflag [#allocation5], %s338
        %s340 = sand.u32 %s91, 1
        %s341 = smul.addr %s340, 8
        %s342 = scalar_lea.vmem [#allocation8], %s341
        // Predicated region
        $region41: #{tpu_custom_call.1} parent=31 // pred_check
          %p343 = pneg %p101
        $region42: #{tpu_custom_call.1} parent=31 // pred_check_branch
          %345 = sbr.rel (%p343) target = $region44
        $region43: #{tpu_custom_call.1} parent=31 // pred_region
          %s347 = ssub.s32 128, 128
          %348 = vsyncadd %s339, %s347
          %s349 = smul.addr %s20, 128
          %s350 = scalar_lea.hbm %s3, %s349
          %s352 = sshll.u32 %s342, 4
          %s353 = int_to_ptr.vmem [resolvable:$true] %s352
          %355 = dma.vmem_to_hbm [thread:$0]  %s353, 128, %s350, %s339
        $region44: #{tpu_custom_call.1} parent=31 // pred_fallthru
          _
      $region32: #{tpu_custom_call.1} parent=5 // pred_fallthru
        _
      %p356 = scmp.le.s32.totalorder 2, %s15
      // Predicated region
      $region45: #{tpu_custom_call.1} parent=5 // pred_check
        %p357 = pneg %p356
      $region46: #{tpu_custom_call.1} parent=5 // pred_check_branch
        %359 = sbr.rel (%p357) target = $region48
      $region47: #{tpu_custom_call.1} parent=5 // pred_region
        %s360 = ssub.s32 %s15, 2
        // Predicated region
        $region49: #{tpu_custom_call.1} parent=47 // pred_check
          %p361 = pneg %p107
        $region50: #{tpu_custom_call.1} parent=47 // pred_check_branch
          %363 = sbr.rel (%p361) target = $region52
        $region51: #{tpu_custom_call.1} parent=47 // pred_region
          %s364 = sand.u32 %s92, 1
          %s365 = scalar_lea.sflag [#allocation5], %s364
          %s366 = sand.u32 %s92, 1
          %s367 = smul.addr %s366, 8
          %s368 = scalar_lea.vmem [#allocation8], %s367
          %369 = dma.done %s365, 128
        $region52: #{tpu_custom_call.1} parent=47 // pred_fallthru
          _
      $region48: #{tpu_custom_call.1} parent=5 // pred_fallthru
        _
    $region6: #{tpu_custom_call.1} parent=1 // loop_footer
      %s19 = sadd.s32 1, %s15
    $region7: #{tpu_custom_call.1} parent=1 // loop_footer_branch
      %14 = sbr.rel target = $region3
    $region8: #{tpu_custom_call.1} parent=1 // loop_exit
      _
    %370 = vsyncpa [#allocation4], 1
    %s371 = scalar_lea.sflag [#allocation4], 1
    %372 = vsyncpa %s371, 1
    %373 = vsyncpa [#allocation5], 1
    %s374 = scalar_lea.sflag [#allocation5], 1
    %375 = vsyncpa %s374, 1
    %376 = vsyncpa [#allocation6], 1
    %s377 = scalar_lea.sflag [#allocation6], 1
    %378 = vsyncpa %s377, 1

</llo_original>
